<compile_context>
chip_gen: v5e
topology: v5e:2x2
jax: 0.10.0
libtpu: 0.0.40
codegen_flags: <defaults>
</compile_context>

<pallas_src>
import functools

import jax
import jax.numpy as jnp
from jax import lax
from jax.experimental import pallas as pl
from jax.experimental.pallas import tpu as pltpu

PROP_STEP = 8      # args.prop_step default
USE_RELU = False   # args.relu default
HIDDEN = 32        # args.hidden default


def _pad128(d):
    return max(128, ((d + 127) // 128) * 128)


def _gcn_kernel(a_ref, x_ref, w1_ref, b1_ref, w2_ref, b2_ref, o_ref,
                *, prop_step, use_relu):
    """Fused GCN forward: GraphConv(in->h) + (prop_step-1) x GraphConv(h->h).

    a_ref, x_ref, w1_ref, w2_ref are bf16; biases are f32; feature dims are
    pre-padded to 128-lane multiples by the wrapper. Accumulation is f32.
    """
    n, h_pad = o_ref.shape

    # Hoist the (N, H) bias broadcasts out of the loop (no CSE of broadcasts).
    b1b = jnp.broadcast_to(b1_ref[...], (n, h_pad))
    b2b = jnp.broadcast_to(b2_ref[...], (n, h_pad))
    w2 = w2_ref[...]  # small (h_pad, h_pad) bf16 tile, keep resident

    # conv1: A @ (X @ W1) + b1  -- bf16 MXU inputs, f32 accumulation.
    xw = jnp.dot(x_ref[...], w1_ref[...], preferred_element_type=jnp.float32)
    h = jnp.dot(a_ref[...], xw.astype(jnp.bfloat16),
                preferred_element_type=jnp.float32) + b1b

    def body(_, h):
        if use_relu:
            h = jnp.maximum(h, 0.0)
        hw = jnp.dot(h.astype(jnp.bfloat16), w2,
                     preferred_element_type=jnp.float32)
        # Source A directly from VMEM at each dot (don't pin it in vregs).
        return jnp.dot(a_ref[...], hw.astype(jnp.bfloat16),
                       preferred_element_type=jnp.float32) + b2b

    # Short fixed trip count -> fully unroll for LLO scheduler visibility.
    h = lax.fori_loop(1, prop_step, body, h, unroll=True)
    o_ref[...] = h.astype(o_ref.dtype)


def gcn_forward(a_norm, x, w1, b1, w2, b2, *, prop_step=PROP_STEP,
                use_relu=USE_RELU):
    n = a_norm.shape[0]
    in_feats, h_feats = w1.shape
    in_pad = _pad128(in_feats)
    h_pad = _pad128(h_feats)

    # Lane-dense zero padding:
    #  * input-feature dim in_feats -> in_pad (extra X columns / W1 rows are
    #    zero, contributing nothing to X @ W1);
    #  * hidden dim h_feats -> h_pad (extra W1/W2 columns, W2 rows and bias
    #    entries are zero, so padded hidden lanes stay exactly 0 every step).
    x_p = jnp.zeros((n, in_pad), jnp.bfloat16)
    x_p = x_p.at[:, :in_feats].set(x.astype(jnp.bfloat16))
    w1_p = jnp.zeros((in_pad, h_pad), jnp.bfloat16)
    w1_p = w1_p.at[:in_feats, :h_feats].set(w1.astype(jnp.bfloat16))
    w2_p = jnp.zeros((h_pad, h_pad), jnp.bfloat16)
    w2_p = w2_p.at[:h_feats, :h_feats].set(w2.astype(jnp.bfloat16))
    b1_p = jnp.zeros((1, h_pad), jnp.float32).at[:, :h_feats].set(
        b1.reshape(1, -1).astype(jnp.float32))
    b2_p = jnp.zeros((1, h_pad), jnp.float32).at[:, :h_feats].set(
        b2.reshape(1, -1).astype(jnp.float32))

    a16 = a_norm.astype(jnp.bfloat16)

    kernel = functools.partial(_gcn_kernel, prop_step=prop_step,
                               use_relu=use_relu)

    # Small problem: single grid point, whole (padded) arrays resident in VMEM.
    out_p = pl.pallas_call(
        kernel,
        out_shape=jax.ShapeDtypeStruct((n, h_pad), jnp.float32),
        in_specs=[
            pl.BlockSpec(a16.shape, lambda: (0, 0)),
            pl.BlockSpec(x_p.shape, lambda: (0, 0)),
            pl.BlockSpec(w1_p.shape, lambda: (0, 0)),
            pl.BlockSpec(b1_p.shape, lambda: (0, 0)),
            pl.BlockSpec(w2_p.shape, lambda: (0, 0)),
            pl.BlockSpec(b2_p.shape, lambda: (0, 0)),
        ],
        out_specs=pl.BlockSpec((n, h_pad), lambda: (0, 0)),
    )(a16, x_p, w1_p, b1_p, w2_p, b2_p)

    # Slice padded lanes back off outside the kernel.
    return out_p[:, :h_feats]


def gcn_reference_f32(a_norm, x, w1, b1, w2, b2, *, prop_step=PROP_STEP,
                      use_relu=USE_RELU):
    """Original (pure f32) module semantics."""
    h = a_norm @ (x @ w1) + b1.reshape(1, -1)
    for _ in range(1, prop_step):
        if use_relu:
            h = jnp.maximum(h, 0.0)
        h = a_norm @ (h @ w2) + b2.reshape(1, -1)
    return h


def gcn_reference_bf16(a_norm, x, w1, b1, w2, b2, *, prop_step=PROP_STEP,
                       use_relu=USE_RELU):
    """Pure-JAX reference mirroring the kernel's bf16-input / f32-accum math."""
    bf = jnp.bfloat16
    a16 = a_norm.astype(bf)
    w216 = w2.astype(bf)
    xw = jnp.dot(x.astype(bf), w1.astype(bf),
                 preferred_element_type=jnp.float32)
    h = jnp.dot(a16, xw.astype(bf),
                preferred_element_type=jnp.float32) + b1.reshape(1, -1)
    for _ in range(1, prop_step):
        if use_relu:
            h = jnp.maximum(h, 0.0)
        hw = jnp.dot(h.astype(bf), w216, preferred_element_type=jnp.float32)
        h = jnp.dot(a16, hw.astype(bf),
                    preferred_element_type=jnp.float32) + b2.reshape(1, -1)
    return h


def make_normalized_adjacency(key, n):
    """Random symmetric adjacency with self loops, D^{-1/2} A D^{-1/2}."""
    bern = jax.random.bernoulli(key, p=0.05, shape=(n, n)).astype(jnp.float32)
    adj = jnp.maximum(bern, bern.T)                         # symmetric
    adj = jnp.maximum(adj, jnp.eye(n, dtype=jnp.float32))   # self loops
    deg = adj.sum(axis=1)
    d_inv_sqrt = 1.0 / jnp.sqrt(deg)
    return adj * d_inv_sqrt[:, None] * d_inv_sqrt[None, :]


if __name__ == "__main__":
    key = jax.random.PRNGKey(0)
    k_adj, k_x, k_w1, k_b1, k_w2, k_b2 = jax.random.split(key, 6)

    N = 128          # number of graph nodes
    IN_FEATS = 64    # input feature dim
    H_FEATS = HIDDEN

    a_norm = make_normalized_adjacency(k_adj, N)
    x = jax.random.normal(k_x, (N, IN_FEATS), dtype=jnp.float32)

    # Deterministic Glorot-style weight init (GraphConv: W (in, out), bias (out,))
    w1 = jax.random.normal(k_w1, (IN_FEATS, H_FEATS), jnp.float32) * (
        1.0 / jnp.sqrt(IN_FEATS))
    b1 = jnp.zeros((H_FEATS,), jnp.float32)
    w2 = jax.random.normal(k_w2, (H_FEATS, H_FEATS), jnp.float32) * (
        1.0 / jnp.sqrt(H_FEATS))
    b2 = jnp.zeros((H_FEATS,), jnp.float32)

    out = gcn_forward(a_norm, x, w1, b1, w2, b2)
    out = jax.block_until_ready(out)
    assert out.shape == (N, H_FEATS)

    # Tight check against a reference that mirrors the kernel's numerics
    # (bf16 MXU inputs, f32 accumulation).
    ref_bf16 = gcn_reference_bf16(a_norm, x, w1, b1, w2, b2)
    assert jnp.allclose(out, ref_bf16, atol=1e-2, rtol=1e-2), (
        "mismatch vs bf16-matched reference")

    # Looser semantic check against the original pure-f32 module math
    # (bf16 rounding compounds over 8 propagation steps).
    ref_f32 = gcn_reference_f32(a_norm, x, w1, b1, w2, b2)
    assert jnp.allclose(out, ref_f32, atol=1e-1, rtol=1e-1), (
        "mismatch vs f32 reference")

    print("KERNEL_OK")
</pallas_src>

<mosaic_0001>
module attributes {stable_mosaic.version = 11 : i64} {
  func.func @_gcn_kernel(%arg0: memref<128x128xbf16, #tpu.memory_space<vmem>>, %arg1: memref<128x128xbf16, #tpu.memory_space<vmem>>, %arg2: memref<128x128xbf16, #tpu.memory_space<vmem>>, %arg3: memref<1x128xf32, #tpu.memory_space<vmem>>, %arg4: memref<128x128xbf16, #tpu.memory_space<vmem>>, %arg5: memref<1x128xf32, #tpu.memory_space<vmem>>, %arg6: memref<128x128xf32, #tpu.memory_space<vmem>>) attributes {dimension_semantics = [], scalar_prefetch = 0 : i64, scratch_operands = 0 : i64, tpu.core_type = #tpu.core_type<tc>} {
    %c0 = arith.constant 0 : index
    %c0_0 = arith.constant 0 : index
    %0 = vector.load %arg3[%c0, %c0_0] : memref<1x128xf32, #tpu.memory_space<vmem>>, vector<1x128xf32>
    %1 = vector.shape_cast %0 : vector<1x128xf32> to vector<1x128xf32>
    %2 = vector.broadcast %1 : vector<1x128xf32> to vector<128x128xf32>
    %c0_1 = arith.constant 0 : index
    %c0_2 = arith.constant 0 : index
    %3 = vector.load %arg5[%c0_1, %c0_2] : memref<1x128xf32, #tpu.memory_space<vmem>>, vector<1x128xf32>
    %4 = vector.shape_cast %3 : vector<1x128xf32> to vector<1x128xf32>
    %5 = vector.broadcast %4 : vector<1x128xf32> to vector<128x128xf32>
    %c0_3 = arith.constant 0 : index
    %c0_4 = arith.constant 0 : index
    %6 = vector.load %arg4[%c0_3, %c0_4] : memref<128x128xbf16, #tpu.memory_space<vmem>>, vector<128x128xbf16>
    %c0_5 = arith.constant 0 : index
    %c0_6 = arith.constant 0 : index
    %7 = vector.load %arg1[%c0_5, %c0_6] : memref<128x128xbf16, #tpu.memory_space<vmem>>, vector<128x128xbf16>
    %c0_7 = arith.constant 0 : index
    %c0_8 = arith.constant 0 : index
    %8 = vector.load %arg2[%c0_7, %c0_8] : memref<128x128xbf16, #tpu.memory_space<vmem>>, vector<128x128xbf16>
    %cst = arith.constant dense<0.000000e+00> : vector<128x128xf32>
    %9 = tpu.matmul %7, %8, %cst {dimension_numbers = #tpu.dot_dimension_numbers<[1], [0], [0], [1], [0, 0, 1, 1], [], []>} : vector<128x128xbf16>, vector<128x128xbf16>, vector<128x128xf32> -> vector<128x128xf32>
    %c0_9 = arith.constant 0 : index
    %c0_10 = arith.constant 0 : index
    %10 = vector.load %arg0[%c0_9, %c0_10] : memref<128x128xbf16, #tpu.memory_space<vmem>>, vector<128x128xbf16>
    %11 = arith.truncf %9 : vector<128x128xf32> to vector<128x128xbf16>
    %cst_11 = arith.constant dense<0.000000e+00> : vector<128x128xf32>
    %12 = tpu.matmul %10, %11, %cst_11 {dimension_numbers = #tpu.dot_dimension_numbers<[1], [0], [0], [1], [0, 0, 1, 1], [], []>} : vector<128x128xbf16>, vector<128x128xbf16>, vector<128x128xf32> -> vector<128x128xf32>
    %13 = arith.addf %12, %2 : vector<128x128xf32>
    %c0_i32 = arith.constant 0 : i32
    %14 = arith.truncf %13 : vector<128x128xf32> to vector<128x128xbf16>
    %cst_12 = arith.constant dense<0.000000e+00> : vector<128x128xf32>
    %15 = tpu.matmul %14, %6, %cst_12 {dimension_numbers = #tpu.dot_dimension_numbers<[1], [0], [0], [1], [0, 0, 1, 1], [], []>} : vector<128x128xbf16>, vector<128x128xbf16>, vector<128x128xf32> -> vector<128x128xf32>
    %c0_13 = arith.constant 0 : index
    %c0_14 = arith.constant 0 : index
    %16 = vector.load %arg0[%c0_13, %c0_14] : memref<128x128xbf16, #tpu.memory_space<vmem>>, vector<128x128xbf16>
    %17 = arith.truncf %15 : vector<128x128xf32> to vector<128x128xbf16>
    %cst_15 = arith.constant dense<0.000000e+00> : vector<128x128xf32>
    %18 = tpu.matmul %16, %17, %cst_15 {dimension_numbers = #tpu.dot_dimension_numbers<[1], [0], [0], [1], [0, 0, 1, 1], [], []>} : vector<128x128xbf16>, vector<128x128xbf16>, vector<128x128xf32> -> vector<128x128xf32>
    %19 = arith.addf %18, %5 : vector<128x128xf32>
    %c1_i32 = arith.constant 1 : i32
    %20 = arith.truncf %19 : vector<128x128xf32> to vector<128x128xbf16>
    %cst_16 = arith.constant dense<0.000000e+00> : vector<128x128xf32>
    %21 = tpu.matmul %20, %6, %cst_16 {dimension_numbers = #tpu.dot_dimension_numbers<[1], [0], [0], [1], [0, 0, 1, 1], [], []>} : vector<128x128xbf16>, vector<128x128xbf16>, vector<128x128xf32> -> vector<128x128xf32>
    %c0_17 = arith.constant 0 : index
    %c0_18 = arith.constant 0 : index
    %22 = vector.load %arg0[%c0_17, %c0_18] : memref<128x128xbf16, #tpu.memory_space<vmem>>, vector<128x128xbf16>
    %23 = arith.truncf %21 : vector<128x128xf32> to vector<128x128xbf16>
    %cst_19 = arith.constant dense<0.000000e+00> : vector<128x128xf32>
    %24 = tpu.matmul %22, %23, %cst_19 {dimension_numbers = #tpu.dot_dimension_numbers<[1], [0], [0], [1], [0, 0, 1, 1], [], []>} : vector<128x128xbf16>, vector<128x128xbf16>, vector<128x128xf32> -> vector<128x128xf32>
    %25 = arith.addf %24, %5 : vector<128x128xf32>
    %c2_i32 = arith.constant 2 : i32
    %26 = arith.truncf %25 : vector<128x128xf32> to vector<128x128xbf16>
    %cst_20 = arith.constant dense<0.000000e+00> : vector<128x128xf32>
    %27 = tpu.matmul %26, %6, %cst_20 {dimension_numbers = #tpu.dot_dimension_numbers<[1], [0], [0], [1], [0, 0, 1, 1], [], []>} : vector<128x128xbf16>, vector<128x128xbf16>, vector<128x128xf32> -> vector<128x128xf32>
    %c0_21 = arith.constant 0 : index
    %c0_22 = arith.constant 0 : index
    %28 = vector.load %arg0[%c0_21, %c0_22] : memref<128x128xbf16, #tpu.memory_space<vmem>>, vector<128x128xbf16>
    %29 = arith.truncf %27 : vector<128x128xf32> to vector<128x128xbf16>
    %cst_23 = arith.constant dense<0.000000e+00> : vector<128x128xf32>
    %30 = tpu.matmul %28, %29, %cst_23 {dimension_numbers = #tpu.dot_dimension_numbers<[1], [0], [0], [1], [0, 0, 1, 1], [], []>} : vector<128x128xbf16>, vector<128x128xbf16>, vector<128x128xf32> -> vector<128x128xf32>
    %31 = arith.addf %30, %5 : vector<128x128xf32>
    %c3_i32 = arith.constant 3 : i32
    %32 = arith.truncf %31 : vector<128x128xf32> to vector<128x128xbf16>
    %cst_24 = arith.constant dense<0.000000e+00> : vector<128x128xf32>
    %33 = tpu.matmul %32, %6, %cst_24 {dimension_numbers = #tpu.dot_dimension_numbers<[1], [0], [0], [1], [0, 0, 1, 1], [], []>} : vector<128x128xbf16>, vector<128x128xbf16>, vector<128x128xf32> -> vector<128x128xf32>
    %c0_25 = arith.constant 0 : index
    %c0_26 = arith.constant 0 : index
    %34 = vector.load %arg0[%c0_25, %c0_26] : memref<128x128xbf16, #tpu.memory_space<vmem>>, vector<128x128xbf16>
    %35 = arith.truncf %33 : vector<128x128xf32> to vector<128x128xbf16>
    %cst_27 = arith.constant dense<0.000000e+00> : vector<128x128xf32>
    %36 = tpu.matmul %34, %35, %cst_27 {dimension_numbers = #tpu.dot_dimension_numbers<[1], [0], [0], [1], [0, 0, 1, 1], [], []>} : vector<128x128xbf16>, vector<128x128xbf16>, vector<128x128xf32> -> vector<128x128xf32>
    %37 = arith.addf %36, %5 : vector<128x128xf32>
    %c4_i32 = arith.constant 4 : i32
    %38 = arith.truncf %37 : vector<128x128xf32> to vector<128x128xbf16>
    %cst_28 = arith.constant dense<0.000000e+00> : vector<128x128xf32>
    %39 = tpu.matmul %38, %6, %cst_28 {dimension_numbers = #tpu.dot_dimension_numbers<[1], [0], [0], [1], [0, 0, 1, 1], [], []>} : vector<128x128xbf16>, vector<128x128xbf16>, vector<128x128xf32> -> vector<128x128xf32>
    %c0_29 = arith.constant 0 : index
    %c0_30 = arith.constant 0 : index
    %40 = vector.load %arg0[%c0_29, %c0_30] : memref<128x128xbf16, #tpu.memory_space<vmem>>, vector<128x128xbf16>
    %41 = arith.truncf %39 : vector<128x128xf32> to vector<128x128xbf16>
    %cst_31 = arith.constant dense<0.000000e+00> : vector<128x128xf32>
    %42 = tpu.matmul %40, %41, %cst_31 {dimension_numbers = #tpu.dot_dimension_numbers<[1], [0], [0], [1], [0, 0, 1, 1], [], []>} : vector<128x128xbf16>, vector<128x128xbf16>, vector<128x128xf32> -> vector<128x128xf32>
    %43 = arith.addf %42, %5 : vector<128x128xf32>
    %c5_i32 = arith.constant 5 : i32
    %44 = arith.truncf %43 : vector<128x128xf32> to vector<128x128xbf16>
    %cst_32 = arith.constant dense<0.000000e+00> : vector<128x128xf32>
    %45 = tpu.matmul %44, %6, %cst_32 {dimension_numbers = #tpu.dot_dimension_numbers<[1], [0], [0], [1], [0, 0, 1, 1], [], []>} : vector<128x128xbf16>, vector<128x128xbf16>, vector<128x128xf32> -> vector<128x128xf32>
    %c0_33 = arith.constant 0 : index
    %c0_34 = arith.constant 0 : index
    %46 = vector.load %arg0[%c0_33, %c0_34] : memref<128x128xbf16, #tpu.memory_space<vmem>>, vector<128x128xbf16>
    %47 = arith.truncf %45 : vector<128x128xf32> to vector<128x128xbf16>
    %cst_35 = arith.constant dense<0.000000e+00> : vector<128x128xf32>
    %48 = tpu.matmul %46, %47, %cst_35 {dimension_numbers = #tpu.dot_dimension_numbers<[1], [0], [0], [1], [0, 0, 1, 1], [], []>} : vector<128x128xbf16>, vector<128x128xbf16>, vector<128x128xf32> -> vector<128x128xf32>
    %49 = arith.addf %48, %5 : vector<128x128xf32>
    %c6_i32 = arith.constant 6 : i32
    %50 = arith.truncf %49 : vector<128x128xf32> to vector<128x128xbf16>
    %cst_36 = arith.constant dense<0.000000e+00> : vector<128x128xf32>
    %51 = tpu.matmul %50, %6, %cst_36 {dimension_numbers = #tpu.dot_dimension_numbers<[1], [0], [0], [1], [0, 0, 1, 1], [], []>} : vector<128x128xbf16>, vector<128x128xbf16>, vector<128x128xf32> -> vector<128x128xf32>
    %c0_37 = arith.constant 0 : index
    %c0_38 = arith.constant 0 : index
    %52 = vector.load %arg0[%c0_37, %c0_38] : memref<128x128xbf16, #tpu.memory_space<vmem>>, vector<128x128xbf16>
    %53 = arith.truncf %51 : vector<128x128xf32> to vector<128x128xbf16>
    %cst_39 = arith.constant dense<0.000000e+00> : vector<128x128xf32>
    %54 = tpu.matmul %52, %53, %cst_39 {dimension_numbers = #tpu.dot_dimension_numbers<[1], [0], [0], [1], [0, 0, 1, 1], [], []>} : vector<128x128xbf16>, vector<128x128xbf16>, vector<128x128xf32> -> vector<128x128xf32>
    %55 = arith.addf %54, %5 : vector<128x128xf32>
    %c0_40 = arith.constant 0 : index
    %c0_41 = arith.constant 0 : index
    %56 = vector.load %arg6[%c0_40, %c0_41] : memref<128x128xf32, #tpu.memory_space<vmem>>, vector<128x128xf32>
    tpu.vector_store %arg6[%c0_40, %c0_41], %55 {strides = array<i32>} : memref<128x128xf32, #tpu.memory_space<vmem>>, vector<128x128xf32>,
    return
  }
}

</mosaic_0001>

<llo_original>
// kernel: tpu_custom_call.1
$region0: #{tpu_custom_call.1}
  #allocation0 [shape = 'u32[]', space=smem, size = 0x4, offset = 0x4, fixed_abs, tag = 'smem constant byte address 0x4 - core index']
  #allocation1 [shape = 'u32[72,128]{1,0:T(1,128)}', space=vmem, size = 0x9000, scoped, tag = 'internal scratch']
  %s0 = inlined_call_operand.hbm [shape: bf16[128,128], index: 0, kind: input, shape index: {}]
  %s1 = inlined_call_operand.hbm [shape: bf16[128,128], index: 1, kind: input, shape index: {}]
  %s2 = inlined_call_operand.hbm [shape: bf16[128,128], index: 2, kind: input, shape index: {}]
  %s3 = inlined_call_operand.vmem [shape: f32[1,128], index: 3, kind: input, shape index: {}]
  %s4 = inlined_call_operand.hbm [shape: bf16[128,128], index: 4, kind: input, shape index: {}]
  %s5 = inlined_call_operand.vmem [shape: f32[1,128], index: 5, kind: input, shape index: {}]
  %s6 = inlined_call_operand.hbm [shape: f32[128,128], index: 6, kind: output, shape index: {}]
  %s7 = sld [smem:[#allocation0]]
  $region50: #{tpu_custom_call.1} parent=0
    _
  %s9 = ssub.s32 1, %s7
  %s10 = scalar_select 0, %s9, %s7
  $region1: #{tpu_custom_call.1} parent=0
    #allocation2 [shape = 'u8[32768]{0}', space=vmem, size = 0x8000, scoped, tag = 'input window, operand 0, single buffered']
    #allocation3 [shape = 's32[1]{0}', space=sflag, size = 0x4, scoped, tag = 'scoped memory for tpu_custom_call.1']
    #allocation4 [shape = 's32[1]{0}', space=sflag, size = 0x4, scoped, tag = 'scoped memory for tpu_custom_call.1']
    #allocation5 [shape = 'u8[32768]{0}', space=vmem, size = 0x8000, scoped, tag = 'input window, operand 1, single buffered']
    #allocation6 [shape = 's32[1]{0}', space=sflag, size = 0x4, scoped, tag = 'scoped memory for tpu_custom_call.1']
    #allocation7 [shape = 'u8[32768]{0}', space=vmem, size = 0x8000, scoped, tag = 'input window, operand 2, single buffered']
    #allocation8 [shape = 'u8[32768]{0}', space=vmem, size = 0x8000, scoped, tag = 'input window, operand 4, single buffered']
    #allocation9 [shape = 's32[1]{0}', space=sflag, size = 0x4, scoped, tag = 'scoped memory for tpu_custom_call.1']
    #allocation10 [shape = 'u8[65536]{0}', space=vmem, size = 0x10000, scoped, tag = 'output window, operand 0, single buffered']
    %11 = vsyncpa [#allocation3], 0
    %12 = vsyncpa [#allocation6], 0
    %13 = vsyncpa [#allocation9], 0
    %14 = vsyncpa [#allocation4], 0
    // Predicated region
    $region2: #{tpu_custom_call.1} parent=1 // pred_check
      _
    $region3: #{tpu_custom_call.1} parent=1 // pred_check_branch
      %16 = sbr.rel (0) target = $region5
    $region4: #{tpu_custom_call.1} parent=1 // pred_region
      %18 = vsyncadd [#allocation3], 0
      %s19 = sshll.u32 %s0, 4
      %s20 = int_to_ptr.hbm [resolvable:$true] %s19
      %s21 = sshll.u32 [#allocation2], 4
      %s22 = int_to_ptr.vmem [resolvable:$true] %s21
      %27 = dma.hbm_to_vmem [thread:$0]  %s20, 1024, %s22, [#allocation3], 64, 64, 4
    $region5: #{tpu_custom_call.1} parent=1 // pred_fallthru
      _
    // Predicated region
    $region6: #{tpu_custom_call.1} parent=1 // pred_check
      _
    $region7: #{tpu_custom_call.1} parent=1 // pred_check_branch
      %29 = sbr.rel (0) target = $region9
    $region8: #{tpu_custom_call.1} parent=1 // pred_region
      %31 = vsyncadd [#allocation6], 0
      %s32 = sshll.u32 %s1, 4
      %s33 = int_to_ptr.hbm [resolvable:$true] %s32
      %s34 = sshll.u32 [#allocation5], 4
      %s35 = int_to_ptr.vmem [resolvable:$true] %s34
      %40 = dma.hbm_to_vmem [thread:$0]  %s33, 1024, %s35, [#allocation6], 64, 64, 4
    $region9: #{tpu_custom_call.1} parent=1 // pred_fallthru
      _
    // Predicated region
    $region10: #{tpu_custom_call.1} parent=1 // pred_check
      _
    $region11: #{tpu_custom_call.1} parent=1 // pred_check_branch
      %42 = sbr.rel (0) target = $region13
    $region12: #{tpu_custom_call.1} parent=1 // pred_region
      %44 = vsyncadd [#allocation6], 0
      %s45 = sshll.u32 %s2, 4
      %s46 = int_to_ptr.hbm [resolvable:$true] %s45
      %s47 = sshll.u32 [#allocation7], 4
      %s48 = int_to_ptr.vmem [resolvable:$true] %s47
      %53 = dma.hbm_to_vmem [thread:$0]  %s46, 1024, %s48, [#allocation6], 64, 64, 4
    $region13: #{tpu_custom_call.1} parent=1 // pred_fallthru
      _
    // Predicated region
    $region14: #{tpu_custom_call.1} parent=1 // pred_check
      _
    $region15: #{tpu_custom_call.1} parent=1 // pred_check_branch
      %55 = sbr.rel (0) target = $region17
    $region16: #{tpu_custom_call.1} parent=1 // pred_region
      _
    $region17: #{tpu_custom_call.1} parent=1 // pred_fallthru
      _
    // Predicated region
    $region18: #{tpu_custom_call.1} parent=1 // pred_check
      _
    $region19: #{tpu_custom_call.1} parent=1 // pred_check_branch
      %57 = sbr.rel (0) target = $region21
    $region20: #{tpu_custom_call.1} parent=1 // pred_region
      %59 = vsyncadd [#allocation9], 0
      %s60 = sshll.u32 %s4, 4
      %s61 = int_to_ptr.hbm [resolvable:$true] %s60
      %s62 = sshll.u32 [#allocation8], 4
      %s63 = int_to_ptr.vmem [resolvable:$true] %s62
      %68 = dma.hbm_to_vmem [thread:$0]  %s61, 1024, %s63, [#allocation9], 64, 64, 4
    $region21: #{tpu_custom_call.1} parent=1 // pred_fallthru
      _
    // Predicated region
    $region22: #{tpu_custom_call.1} parent=1 // pred_check
      _
    $region23: #{tpu_custom_call.1} parent=1 // pred_check_branch
      %70 = sbr.rel (0) target = $region25
    $region24: #{tpu_custom_call.1} parent=1 // pred_region
      _
    $region25: #{tpu_custom_call.1} parent=1 // pred_fallthru
      _
    // Predicated region
    $region26: #{tpu_custom_call.1} parent=1 // pred_check
      _
    $region27: #{tpu_custom_call.1} parent=1 // pred_check_branch
      %72 = sbr.rel (0) target = $region29
    $region28: #{tpu_custom_call.1} parent=1 // pred_region
      %74 = dma.done [#allocation3], 1024
    $region29: #{tpu_custom_call.1} parent=1 // pred_fallthru
      _
    // Predicated region
    $region30: #{tpu_custom_call.1} parent=1 // pred_check
      _
    $region31: #{tpu_custom_call.1} parent=1 // pred_check_branch
      %76 = sbr.rel (0) target = $region33
    $region32: #{tpu_custom_call.1} parent=1 // pred_region
      %78 = dma.done [#allocation6], 1024
    $region33: #{tpu_custom_call.1} parent=1 // pred_fallthru
      _
    // Predicated region
    $region34: #{tpu_custom_call.1} parent=1 // pred_check
      _
    $region35: #{tpu_custom_call.1} parent=1 // pred_check_branch
      %80 = sbr.rel (0) target = $region37
    $region36: #{tpu_custom_call.1} parent=1 // pred_region
      %82 = dma.done [#allocation6], 1024
    $region37: #{tpu_custom_call.1} parent=1 // pred_fallthru
      _
    // Predicated region
    $region38: #{tpu_custom_call.1} parent=1 // pred_check
      _
    $region39: #{tpu_custom_call.1} parent=1 // pred_check_branch
      %84 = sbr.rel (0) target = $region41
    $region40: #{tpu_custom_call.1} parent=1 // pred_region
      %86 = dma.done [#allocation9], 1024
    $region41: #{tpu_custom_call.1} parent=1 // pred_fallthru
      _
    %v87 = vld [vmem:[%s3] sm:$0x1]
    %v89 = vperm.slane %v87, 0
    %v91 = vld [vmem:[%s5] sm:$0x1]
    %v93 = vperm.slane %v91, 0
    %v95 = vld [vmem:[#allocation8] sm:$0xf]
    %v96 = vld [vmem:[#allocation8 + $0x4] sm:$0xf]
    %v97 = vld [vmem:[#allocation8 + $0x8] sm:$0xf]
    %v98 = vld [vmem:[#allocation8 + $0xc] sm:$0xf]
    %v99 = vld [vmem:[#allocation8 + $0x10] sm:$0xf]
    %v100 = vld [vmem:[#allocation8 + $0x14] sm:$0xf]
    %v101 = vld [vmem:[#allocation8 + $0x18] sm:$0xf]
    %v102 = vld [vmem:[#allocation8 + $0x1c] sm:$0xf]
    %v103 = vld [vmem:[#allocation8 + $0x20] sm:$0xf]
    %v104 = vld [vmem:[#allocation8 + $0x24] sm:$0xf]
    %v105 = vld [vmem:[#allocation8 + $0x28] sm:$0xf]
    %v106 = vld [vmem:[#allocation8 + $0x2c] sm:$0xf]
    %v107 = vld [vmem:[#allocation8 + $0x30] sm:$0xf]
    %v108 = vld [vmem:[#allocation8 + $0x34] sm:$0xf]
    %v109 = vld [vmem:[#allocation8 + $0x38] sm:$0xf]
    %v110 = vld [vmem:[#allocation8 + $0x3c] sm:$0xf]
    %v111 = vld [vmem:[#allocation5] sm:$0xf]
    %v112 = vld [vmem:[#allocation5 + $0x4] sm:$0xf]
    %v113 = vld [vmem:[#allocation5 + $0x8] sm:$0xf]
    %v114 = vld [vmem:[#allocation5 + $0xc] sm:$0xf]
    %v115 = vld [vmem:[#allocation5 + $0x10] sm:$0xf]
    %v116 = vld [vmem:[#allocation5 + $0x14] sm:$0xf]
    %v117 = vld [vmem:[#allocation5 + $0x18] sm:$0xf]
    %v118 = vld [vmem:[#allocation5 + $0x1c] sm:$0xf]
    %v119 = vld [vmem:[#allocation5 + $0x20] sm:$0xf]
    %v120 = vld [vmem:[#allocation5 + $0x24] sm:$0xf]
    %v121 = vld [vmem:[#allocation5 + $0x28] sm:$0xf]
    %v122 = vld [vmem:[#allocation5 + $0x2c] sm:$0xf]
    %v123 = vld [vmem:[#allocation5 + $0x30] sm:$0xf]
    %v124 = vld [vmem:[#allocation5 + $0x34] sm:$0xf]
    %v125 = vld [vmem:[#allocation5 + $0x38] sm:$0xf]
    %v126 = vld [vmem:[#allocation5 + $0x3c] sm:$0xf]
    %v127 = vld [vmem:[#allocation7] sm:$0xf]
    %v128 = vld [vmem:[#allocation7 + $0x4] sm:$0xf]
    %v129 = vld [vmem:[#allocation7 + $0x8] sm:$0xf]
    %v130 = vld [vmem:[#allocation7 + $0xc] sm:$0xf]
    %v131 = vld [vmem:[#allocation7 + $0x10] sm:$0xf]
    %v132 = vld [vmem:[#allocation7 + $0x14] sm:$0xf]
    %v133 = vld [vmem:[#allocation7 + $0x18] sm:$0xf]
    %v134 = vld [vmem:[#allocation7 + $0x1c] sm:$0xf]
    %v135 = vld [vmem:[#allocation7 + $0x20] sm:$0xf]
    %v136 = vld [vmem:[#allocation7 + $0x24] sm:$0xf]
    %v137 = vld [vmem:[#allocation7 + $0x28] sm:$0xf]
    %v138 = vld [vmem:[#allocation7 + $0x2c] sm:$0xf]
    %v139 = vld [vmem:[#allocation7 + $0x30] sm:$0xf]
    %v140 = vld [vmem:[#allocation7 + $0x34] sm:$0xf]
    %v141 = vld [vmem:[#allocation7 + $0x38] sm:$0xf]
    %v142 = vld [vmem:[#allocation7 + $0x3c] sm:$0xf]
    %v159 = vunpack.c.l.b16 %v111
    %v160 = vunpack.c.l.b16 %v112
    %v161 = vunpack.c.l.b16 %v113
    %v162 = vunpack.c.l.b16 %v114
    %v163 = vunpack.c.l.b16 %v115
    %v164 = vunpack.c.l.b16 %v116
    %v165 = vunpack.c.l.b16 %v117
    %v166 = vunpack.c.l.b16 %v118
    %v167 = vunpack.c.l.b16 %v119
    %v168 = vunpack.c.l.b16 %v120
    %v169 = vunpack.c.l.b16 %v121
    %v170 = vunpack.c.l.b16 %v122
    %v171 = vunpack.c.l.b16 %v123
    %v172 = vunpack.c.l.b16 %v124
    %v173 = vunpack.c.l.b16 %v125
    %v174 = vunpack.c.l.b16 %v126
    %v175 = vpack.c.b16 %v160, %v159
    %v176 = vpack.c.b16 %v162, %v161
    %v177 = vpack.c.b16 %v164, %v163
    %v178 = vpack.c.b16 %v166, %v165
    %v179 = vpack.c.b16 %v168, %v167
    %v180 = vpack.c.b16 %v170, %v169
    %v181 = vpack.c.b16 %v172, %v171
    %v182 = vpack.c.b16 %v174, %v173
    %v207 = vunpack.c.l.b16 %v127
    %v208 = vunpack.c.l.b16 %v128
    %v209 = vunpack.c.l.b16 %v129
    %v210 = vunpack.c.l.b16 %v130
    %v211 = vunpack.c.l.b16 %v131
    %v212 = vunpack.c.l.b16 %v132
    %v213 = vunpack.c.l.b16 %v133
    %v214 = vunpack.c.l.b16 %v134
    %v215 = vunpack.c.l.b16 %v135
    %v216 = vunpack.c.l.b16 %v136
    %v217 = vunpack.c.l.b16 %v137
    %v218 = vunpack.c.l.b16 %v138
    %v219 = vunpack.c.l.b16 %v139
    %v220 = vunpack.c.l.b16 %v140
    %v221 = vunpack.c.l.b16 %v141
    %v222 = vunpack.c.l.b16 %v142
    %v223 = vpack.c.b16 %v208, %v207
    %v224 = vpack.c.b16 %v210, %v209
    %v225 = vpack.c.b16 %v212, %v211
    %v226 = vpack.c.b16 %v214, %v213
    %v227 = vpack.c.b16 %v216, %v215
    %v228 = vpack.c.b16 %v218, %v217
    %v229 = vpack.c.b16 %v220, %v219
    %v230 = vpack.c.b16 %v222, %v221
    %239 = vmatpush.bf16.msra.mxu0 %v230
    %240 = vmatpush.bf16.msra.mxu0 %v229
    %241 = vmatpush.bf16.msra.mxu0 %v228
    %242 = vmatpush.bf16.msra.mxu0 %v227
    %243 = vmatpush.bf16.msra.mxu0 %v226
    %244 = vmatpush.bf16.msra.mxu0 %v225
    %245 = vmatpush.bf16.msra.mxu0 %v224
    %246 = vmatpush.bf16.msra.mxu0 %v223
    %247 = vmatmul.bf16.gmra.mxu0 %v175
    %v248 = vpop.f32.mrf.mxu0
    %v249 = vadd.f32 0.0, %v248
    %v250 = vpop.f32.mrf.mxu0
    %v251 = vadd.f32 0.0, %v250
    %252 = vmatmul.bf16.gmra.mxu0 %v176
    %v253 = vpop.f32.mrf.mxu0
    %v254 = vadd.f32 0.0, %v253
    %v255 = vpop.f32.mrf.mxu0
    %v256 = vadd.f32 0.0, %v255
    %257 = vmatmul.bf16.gmra.mxu0 %v177
    %v258 = vpop.f32.mrf.mxu0
    %v259 = vadd.f32 0.0, %v258
    %v260 = vpop.f32.mrf.mxu0
    %v261 = vadd.f32 0.0, %v260
    %262 = vmatmul.bf16.gmra.mxu0 %v178
    %v263 = vpop.f32.mrf.mxu0
    %v264 = vadd.f32 0.0, %v263
    %v265 = vpop.f32.mrf.mxu0
    %v266 = vadd.f32 0.0, %v265
    %267 = vmatmul.bf16.gmra.mxu0 %v179
    %v268 = vpop.f32.mrf.mxu0
    %v269 = vadd.f32 0.0, %v268
    %v270 = vpop.f32.mrf.mxu0
    %v271 = vadd.f32 0.0, %v270
    %272 = vmatmul.bf16.gmra.mxu0 %v180
    %v273 = vpop.f32.mrf.mxu0
    %v274 = vadd.f32 0.0, %v273
    %v275 = vpop.f32.mrf.mxu0
    %v276 = vadd.f32 0.0, %v275
    %277 = vmatmul.bf16.gmra.mxu0 %v181
    %v278 = vpop.f32.mrf.mxu0
    %v279 = vadd.f32 0.0, %v278
    %v280 = vpop.f32.mrf.mxu0
    %v281 = vadd.f32 0.0, %v280
    %282 = vmatmul.bf16.gmra.mxu0 %v182
    %v283 = vpop.f32.mrf.mxu0
    %v284 = vadd.f32 0.0, %v283
    %v285 = vpop.f32.mrf.mxu0
    %v286 = vadd.f32 0.0, %v285
    %287 = vdwg.mxu0
    %v288 = vld [vmem:[#allocation2] sm:$0xf]
    %v289 = vld [vmem:[#allocation2 + $0x4] sm:$0xf]
    %v290 = vld [vmem:[#allocation2 + $0x8] sm:$0xf]
    %v291 = vld [vmem:[#allocation2 + $0xc] sm:$0xf]
    %v292 = vld [vmem:[#allocation2 + $0x10] sm:$0xf]
    %v293 = vld [vmem:[#allocation2 + $0x14] sm:$0xf]
    %v294 = vld [vmem:[#allocation2 + $0x18] sm:$0xf]
    %v295 = vld [vmem:[#allocation2 + $0x1c] sm:$0xf]
    %v296 = vld [vmem:[#allocation2 + $0x20] sm:$0xf]
    %v297 = vld [vmem:[#allocation2 + $0x24] sm:$0xf]
    %v298 = vld [vmem:[#allocation2 + $0x28] sm:$0xf]
    %v299 = vld [vmem:[#allocation2 + $0x2c] sm:$0xf]
    %v300 = vld [vmem:[#allocation2 + $0x30] sm:$0xf]
    %v301 = vld [vmem:[#allocation2 + $0x34] sm:$0xf]
    %v302 = vld [vmem:[#allocation2 + $0x38] sm:$0xf]
    %v303 = vld [vmem:[#allocation2 + $0x3c] sm:$0xf]
    %v304 = vpack.c.bf16 %v251, %v249
    %v305 = vpack.c.bf16 %v256, %v254
    %v306 = vpack.c.bf16 %v261, %v259
    %v307 = vpack.c.bf16 %v266, %v264
    %v308 = vpack.c.bf16 %v271, %v269
    %v309 = vpack.c.bf16 %v276, %v274
    %v310 = vpack.c.bf16 %v281, %v279
    %v311 = vpack.c.bf16 %v286, %v284
    %v328 = vunpack.c.l.b16 %v288
    %v329 = vunpack.c.l.b16 %v289
    %v330 = vunpack.c.l.b16 %v290
    %v331 = vunpack.c.l.b16 %v291
    %v332 = vunpack.c.l.b16 %v292
    %v333 = vunpack.c.l.b16 %v293
    %v334 = vunpack.c.l.b16 %v294
    %v335 = vunpack.c.l.b16 %v295
    %v336 = vunpack.c.l.b16 %v296
    %v337 = vunpack.c.l.b16 %v297
    %v338 = vunpack.c.l.b16 %v298
    %v339 = vunpack.c.l.b16 %v299
    %v340 = vunpack.c.l.b16 %v300
    %v341 = vunpack.c.l.b16 %v301
    %v342 = vunpack.c.l.b16 %v302
    %v343 = vunpack.c.l.b16 %v303
    %v344 = vpack.c.b16 %v329, %v328
    %v345 = vpack.c.b16 %v331, %v330
    %v346 = vpack.c.b16 %v333, %v332
    %v347 = vpack.c.b16 %v335, %v334
    %v348 = vpack.c.b16 %v337, %v336
    %v349 = vpack.c.b16 %v339, %v338
    %v350 = vpack.c.b16 %v341, %v340
    %v351 = vpack.c.b16 %v343, %v342
    %360 = vmatpush.bf16.msra.mxu0 %v311
    %361 = vmatpush.bf16.msra.mxu0 %v310
    %362 = vmatpush.bf16.msra.mxu0 %v309
    %363 = vmatpush.bf16.msra.mxu0 %v308
    %364 = vmatpush.bf16.msra.mxu0 %v307
    %365 = vmatpush.bf16.msra.mxu0 %v306
    %366 = vmatpush.bf16.msra.mxu0 %v305
    %367 = vmatpush.bf16.msra.mxu0 %v304
    %368 = vmatmul.bf16.gmra.mxu0 %v344
    %v369 = vpop.f32.mrf.mxu0
    %v370 = vadd.f32 %v89, %v369
    %v371 = vpop.f32.mrf.mxu0
    %v372 = vadd.f32 %v89, %v371
    %373 = vmatmul.bf16.gmra.mxu0 %v345
    %v374 = vpop.f32.mrf.mxu0
    %v375 = vadd.f32 %v89, %v374
    %v376 = vpop.f32.mrf.mxu0
    %v377 = vadd.f32 %v89, %v376
    %378 = vmatmul.bf16.gmra.mxu0 %v346
    %v379 = vpop.f32.mrf.mxu0
    %v380 = vadd.f32 %v89, %v379
    %v381 = vpop.f32.mrf.mxu0
    %v382 = vadd.f32 %v89, %v381
    %383 = vmatmul.bf16.gmra.mxu0 %v347
    %v384 = vpop.f32.mrf.mxu0
    %v385 = vadd.f32 %v89, %v384
    %v386 = vpop.f32.mrf.mxu0
    %v387 = vadd.f32 %v89, %v386
    %388 = vmatmul.bf16.gmra.mxu0 %v348
    %v389 = vpop.f32.mrf.mxu0
    %v390 = vadd.f32 %v89, %v389
    %v391 = vpop.f32.mrf.mxu0
    %v392 = vadd.f32 %v89, %v391
    %393 = vmatmul.bf16.gmra.mxu0 %v349
    %v394 = vpop.f32.mrf.mxu0
    %v395 = vadd.f32 %v89, %v394
    %v396 = vpop.f32.mrf.mxu0
    %v397 = vadd.f32 %v89, %v396
    %398 = vmatmul.bf16.gmra.mxu0 %v350
    %v399 = vpop.f32.mrf.mxu0
    %v400 = vadd.f32 %v89, %v399
    %v401 = vpop.f32.mrf.mxu0
    %v402 = vadd.f32 %v89, %v401
    %403 = vmatmul.bf16.gmra.mxu0 %v351
    %v404 = vpop.f32.mrf.mxu0
    %v405 = vadd.f32 %v89, %v404
    %v406 = vpop.f32.mrf.mxu0
    %v407 = vadd.f32 %v89, %v406
    %408 = vdwg.mxu0
    %v409 = vpack.c.bf16 %v372, %v370
    %v410 = vpack.c.bf16 %v377, %v375
    %v411 = vpack.c.bf16 %v382, %v380
    %v412 = vpack.c.bf16 %v387, %v385
    %v413 = vpack.c.bf16 %v392, %v390
    %v414 = vpack.c.bf16 %v397, %v395
    %v415 = vpack.c.bf16 %v402, %v400
    %v416 = vpack.c.bf16 %v407, %v405
    %v433 = vunpack.c.l.b16 %v95
    %v434 = vunpack.c.l.b16 %v96
    %v435 = vunpack.c.l.b16 %v97
    %v436 = vunpack.c.l.b16 %v98
    %v437 = vunpack.c.l.b16 %v99
    %v438 = vunpack.c.l.b16 %v100
    %v439 = vunpack.c.l.b16 %v101
    %v440 = vunpack.c.l.b16 %v102
    %v441 = vunpack.c.l.b16 %v103
    %v442 = vunpack.c.l.b16 %v104
    %v443 = vunpack.c.l.b16 %v105
    %v444 = vunpack.c.l.b16 %v106
    %v445 = vunpack.c.l.b16 %v107
    %v446 = vunpack.c.l.b16 %v108
    %v447 = vunpack.c.l.b16 %v109
    %v448 = vunpack.c.l.b16 %v110
    %v449 = vpack.c.b16 %v434, %v433
    %v450 = vpack.c.b16 %v436, %v435
    %v451 = vpack.c.b16 %v438, %v437
    %v452 = vpack.c.b16 %v440, %v439
    %v453 = vpack.c.b16 %v442, %v441
    %v454 = vpack.c.b16 %v444, %v443
    %v455 = vpack.c.b16 %v446, %v445
    %v456 = vpack.c.b16 %v448, %v447
    %465 = vmatpush.bf16.msra.mxu0 %v456
    %466 = vmatpush.bf16.msra.mxu0 %v455
    %467 = vmatpush.bf16.msra.mxu0 %v454
    %468 = vmatpush.bf16.msra.mxu0 %v453
    %469 = vmatpush.bf16.msra.mxu0 %v452
    %470 = vmatpush.bf16.msra.mxu0 %v451
    %471 = vmatpush.bf16.msra.mxu0 %v450
    %472 = vmatpush.bf16.msra.mxu0 %v449
    %473 = vmatmul.bf16.gmra.mxu0 %v409
    %v474 = vpop.f32.mrf.mxu0
    %v475 = vadd.f32 0.0, %v474
    %v476 = vpop.f32.mrf.mxu0
    %v477 = vadd.f32 0.0, %v476
    %478 = vmatmul.bf16.gmra.mxu0 %v410
    %v479 = vpop.f32.mrf.mxu0
    %v480 = vadd.f32 0.0, %v479
    %v481 = vpop.f32.mrf.mxu0
    %v482 = vadd.f32 0.0, %v481
    %483 = vmatmul.bf16.gmra.mxu0 %v411
    %v484 = vpop.f32.mrf.mxu0
    %v485 = vadd.f32 0.0, %v484
    %v486 = vpop.f32.mrf.mxu0
    %v487 = vadd.f32 0.0, %v486
    %488 = vmatmul.bf16.gmra.mxu0 %v412
    %v489 = vpop.f32.mrf.mxu0
    %v490 = vadd.f32 0.0, %v489
    %v491 = vpop.f32.mrf.mxu0
    %v492 = vadd.f32 0.0, %v491
    %493 = vmatmul.bf16.gmra.mxu0 %v413
    %v494 = vpop.f32.mrf.mxu0
    %v495 = vadd.f32 0.0, %v494
    %v496 = vpop.f32.mrf.mxu0
    %v497 = vadd.f32 0.0, %v496
    %498 = vmatmul.bf16.gmra.mxu0 %v414
    %v499 = vpop.f32.mrf.mxu0
    %v500 = vadd.f32 0.0, %v499
    %v501 = vpop.f32.mrf.mxu0
    %v502 = vadd.f32 0.0, %v501
    %503 = vmatmul.bf16.gmra.mxu0 %v415
    %v504 = vpop.f32.mrf.mxu0
    %v505 = vadd.f32 0.0, %v504
    %v506 = vpop.f32.mrf.mxu0
    %v507 = vadd.f32 0.0, %v506
    %508 = vmatmul.bf16.gmra.mxu0 %v416
    %v509 = vpop.f32.mrf.mxu0
    %v510 = vadd.f32 0.0, %v509
    %v511 = vpop.f32.mrf.mxu0
    %v512 = vadd.f32 0.0, %v511
    %513 = vdwg.mxu0
    %v514 = vpack.c.bf16 %v477, %v475
    %v515 = vpack.c.bf16 %v482, %v480
    %v516 = vpack.c.bf16 %v487, %v485
    %v517 = vpack.c.bf16 %v492, %v490
    %v518 = vpack.c.bf16 %v497, %v495
    %v519 = vpack.c.bf16 %v502, %v500
    %v520 = vpack.c.bf16 %v507, %v505
    %v521 = vpack.c.bf16 %v512, %v510
    %522 = vmatpush.bf16.msra.mxu0 %v521
    %523 = vmatpush.bf16.msra.mxu0 %v520
    %524 = vmatpush.bf16.msra.mxu0 %v519
    %525 = vmatpush.bf16.msra.mxu0 %v518
    %526 = vmatpush.bf16.msra.mxu0 %v517
    %527 = vmatpush.bf16.msra.mxu0 %v516
    %528 = vmatpush.bf16.msra.mxu0 %v515
    %529 = vmatpush.bf16.msra.mxu0 %v514
    %530 = vmatmul.bf16.gmra.mxu0 %v344
    %v531 = vpop.f32.mrf.mxu0
    %v532 = vadd.f32 %v93, %v531
    %v533 = vpop.f32.mrf.mxu0
    %v534 = vadd.f32 %v93, %v533
    %535 = vmatmul.bf16.gmra.mxu0 %v345
    %v536 = vpop.f32.mrf.mxu0
    %v537 = vadd.f32 %v93, %v536
    %v538 = vpop.f32.mrf.mxu0
    %v539 = vadd.f32 %v93, %v538
    %540 = vmatmul.bf16.gmra.mxu0 %v346
    %v541 = vpop.f32.mrf.mxu0
    %v542 = vadd.f32 %v93, %v541
    %v543 = vpop.f32.mrf.mxu0
    %v544 = vadd.f32 %v93, %v543
    %545 = vmatmul.bf16.gmra.mxu0 %v347
    %v546 = vpop.f32.mrf.mxu0
    %v547 = vadd.f32 %v93, %v546
    %v548 = vpop.f32.mrf.mxu0
    %v549 = vadd.f32 %v93, %v548
    %550 = vmatmul.bf16.gmra.mxu0 %v348
    %v551 = vpop.f32.mrf.mxu0
    %v552 = vadd.f32 %v93, %v551
    %v553 = vpop.f32.mrf.mxu0
    %v554 = vadd.f32 %v93, %v553
    %555 = vmatmul.bf16.gmra.mxu0 %v349
    %v556 = vpop.f32.mrf.mxu0
    %v557 = vadd.f32 %v93, %v556
    %v558 = vpop.f32.mrf.mxu0
    %v559 = vadd.f32 %v93, %v558
    %560 = vmatmul.bf16.gmra.mxu0 %v350
    %v561 = vpop.f32.mrf.mxu0
    %v562 = vadd.f32 %v93, %v561
    %v563 = vpop.f32.mrf.mxu0
    %v564 = vadd.f32 %v93, %v563
    %565 = vmatmul.bf16.gmra.mxu0 %v351
    %v566 = vpop.f32.mrf.mxu0
    %v567 = vadd.f32 %v93, %v566
    %v568 = vpop.f32.mrf.mxu0
    %v569 = vadd.f32 %v93, %v568
    %570 = vdwg.mxu0
    %v571 = vpack.c.bf16 %v534, %v532
    %v572 = vpack.c.bf16 %v539, %v537
    %v573 = vpack.c.bf16 %v544, %v542
    %v574 = vpack.c.bf16 %v549, %v547
    %v575 = vpack.c.bf16 %v554, %v552
    %v576 = vpack.c.bf16 %v559, %v557
    %v577 = vpack.c.bf16 %v564, %v562
    %v578 = vpack.c.bf16 %v569, %v567
    %579 = vmatpush.bf16.msra.mxu0 %v456
    %580 = vmatpush.bf16.msra.mxu0 %v455
    %581 = vmatpush.bf16.msra.mxu0 %v454
    %582 = vmatpush.bf16.msra.mxu0 %v453
    %583 = vmatpush.bf16.msra.mxu0 %v452
    %584 = vmatpush.bf16.msra.mxu0 %v451
    %585 = vmatpush.bf16.msra.mxu0 %v450
    %586 = vmatpush.bf16.msra.mxu0 %v449
    %587 = vmatmul.bf16.gmra.mxu0 %v571
    %v588 = vpop.f32.mrf.mxu0
    %v589 = vadd.f32 0.0, %v588
    %v590 = vpop.f32.mrf.mxu0
    %v591 = vadd.f32 0.0, %v590
    %592 = vmatmul.bf16.gmra.mxu0 %v572
    %v593 = vpop.f32.mrf.mxu0
    %v594 = vadd.f32 0.0, %v593
    %v595 = vpop.f32.mrf.mxu0
    %v596 = vadd.f32 0.0, %v595
    %597 = vmatmul.bf16.gmra.mxu0 %v573
    %v598 = vpop.f32.mrf.mxu0
    %v599 = vadd.f32 0.0, %v598
    %v600 = vpop.f32.mrf.mxu0
    %v601 = vadd.f32 0.0, %v600
    %602 = vmatmul.bf16.gmra.mxu0 %v574
    %v603 = vpop.f32.mrf.mxu0
    %v604 = vadd.f32 0.0, %v603
    %v605 = vpop.f32.mrf.mxu0
    %v606 = vadd.f32 0.0, %v605
    %607 = vmatmul.bf16.gmra.mxu0 %v575
    %v608 = vpop.f32.mrf.mxu0
    %v609 = vadd.f32 0.0, %v608
    %v610 = vpop.f32.mrf.mxu0
    %v611 = vadd.f32 0.0, %v610
    %612 = vmatmul.bf16.gmra.mxu0 %v576
    %v613 = vpop.f32.mrf.mxu0
    %v614 = vadd.f32 0.0, %v613
    %v615 = vpop.f32.mrf.mxu0
    %v616 = vadd.f32 0.0, %v615
    %617 = vmatmul.bf16.gmra.mxu0 %v577
    %v618 = vpop.f32.mrf.mxu0
    %v619 = vadd.f32 0.0, %v618
    %v620 = vpop.f32.mrf.mxu0
    %v621 = vadd.f32 0.0, %v620
    %622 = vmatmul.bf16.gmra.mxu0 %v578
    %v623 = vpop.f32.mrf.mxu0
    %v624 = vadd.f32 0.0, %v623
    %v625 = vpop.f32.mrf.mxu0
    %v626 = vadd.f32 0.0, %v625
    %627 = vdwg.mxu0
    %v628 = vpack.c.bf16 %v591, %v589
    %v629 = vpack.c.bf16 %v596, %v594
    %v630 = vpack.c.bf16 %v601, %v599
    %v631 = vpack.c.bf16 %v606, %v604
    %v632 = vpack.c.bf16 %v611, %v609
    %v633 = vpack.c.bf16 %v616, %v614
    %v634 = vpack.c.bf16 %v621, %v619
    %v635 = vpack.c.bf16 %v626, %v624
    %636 = vmatpush.bf16.msra.mxu0 %v635
    %637 = vmatpush.bf16.msra.mxu0 %v634
    %638 = vmatpush.bf16.msra.mxu0 %v633
    %639 = vmatpush.bf16.msra.mxu0 %v632
    %640 = vmatpush.bf16.msra.mxu0 %v631
    %641 = vmatpush.bf16.msra.mxu0 %v630
    %642 = vmatpush.bf16.msra.mxu0 %v629
    %643 = vmatpush.bf16.msra.mxu0 %v628
    %644 = vmatmul.bf16.gmra.mxu0 %v344
    %v645 = vpop.f32.mrf.mxu0
    %v646 = vadd.f32 %v93, %v645
    %v647 = vpop.f32.mrf.mxu0
    %v648 = vadd.f32 %v93, %v647
    %649 = vmatmul.bf16.gmra.mxu0 %v345
    %v650 = vpop.f32.mrf.mxu0
    %v651 = vadd.f32 %v93, %v650
    %v652 = vpop.f32.mrf.mxu0
    %v653 = vadd.f32 %v93, %v652
    %654 = vmatmul.bf16.gmra.mxu0 %v346
    %v655 = vpop.f32.mrf.mxu0
    %v656 = vadd.f32 %v93, %v655
    %v657 = vpop.f32.mrf.mxu0
    %v658 = vadd.f32 %v93, %v657
    %659 = vmatmul.bf16.gmra.mxu0 %v347
    %v660 = vpop.f32.mrf.mxu0
    %v661 = vadd.f32 %v93, %v660
    %v662 = vpop.f32.mrf.mxu0
    %v663 = vadd.f32 %v93, %v662
    %664 = vmatmul.bf16.gmra.mxu0 %v348
    %v665 = vpop.f32.mrf.mxu0
    %v666 = vadd.f32 %v93, %v665
    %v667 = vpop.f32.mrf.mxu0
    %v668 = vadd.f32 %v93, %v667
    %669 = vmatmul.bf16.gmra.mxu0 %v349
    %v670 = vpop.f32.mrf.mxu0
    %v671 = vadd.f32 %v93, %v670
    %v672 = vpop.f32.mrf.mxu0
    %v673 = vadd.f32 %v93, %v672
    %674 = vmatmul.bf16.gmra.mxu0 %v350
    %v675 = vpop.f32.mrf.mxu0
    %v676 = vadd.f32 %v93, %v675
    %v677 = vpop.f32.mrf.mxu0
    %v678 = vadd.f32 %v93, %v677
    %679 = vmatmul.bf16.gmra.mxu0 %v351
    %v680 = vpop.f32.mrf.mxu0
    %v681 = vadd.f32 %v93, %v680
    %v682 = vpop.f32.mrf.mxu0
    %v683 = vadd.f32 %v93, %v682
    %684 = vdwg.mxu0
    %v685 = vpack.c.bf16 %v648, %v646
    %v686 = vpack.c.bf16 %v653, %v651
    %v687 = vpack.c.bf16 %v658, %v656
    %v688 = vpack.c.bf16 %v663, %v661
    %v689 = vpack.c.bf16 %v668, %v666
    %v690 = vpack.c.bf16 %v673, %v671
    %v691 = vpack.c.bf16 %v678, %v676
    %v692 = vpack.c.bf16 %v683, %v681
    %693 = vmatpush.bf16.msra.mxu0 %v456
    %694 = vmatpush.bf16.msra.mxu0 %v455
    %695 = vmatpush.bf16.msra.mxu0 %v454
    %696 = vmatpush.bf16.msra.mxu0 %v453
    %697 = vmatpush.bf16.msra.mxu0 %v452
    %698 = vmatpush.bf16.msra.mxu0 %v451
    %699 = vmatpush.bf16.msra.mxu0 %v450
    %700 = vmatpush.bf16.msra.mxu0 %v449
    %701 = vmatmul.bf16.gmra.mxu0 %v685
    %v702 = vpop.f32.mrf.mxu0
    %v703 = vadd.f32 0.0, %v702
    %v704 = vpop.f32.mrf.mxu0
    %v705 = vadd.f32 0.0, %v704
    %706 = vmatmul.bf16.gmra.mxu0 %v686
    %v707 = vpop.f32.mrf.mxu0
    %v708 = vadd.f32 0.0, %v707
    %v709 = vpop.f32.mrf.mxu0
    %v710 = vadd.f32 0.0, %v709
    %711 = vmatmul.bf16.gmra.mxu0 %v687
    %v712 = vpop.f32.mrf.mxu0
    %v713 = vadd.f32 0.0, %v712
    %v714 = vpop.f32.mrf.mxu0
    %v715 = vadd.f32 0.0, %v714
    %716 = vmatmul.bf16.gmra.mxu0 %v688
    %v717 = vpop.f32.mrf.mxu0
    %v718 = vadd.f32 0.0, %v717
    %v719 = vpop.f32.mrf.mxu0
    %v720 = vadd.f32 0.0, %v719
    %721 = vmatmul.bf16.gmra.mxu0 %v689
    %v722 = vpop.f32.mrf.mxu0
    %v723 = vadd.f32 0.0, %v722
    %v724 = vpop.f32.mrf.mxu0
    %v725 = vadd.f32 0.0, %v724
    %726 = vmatmul.bf16.gmra.mxu0 %v690
    %v727 = vpop.f32.mrf.mxu0
    %v728 = vadd.f32 0.0, %v727
    %v729 = vpop.f32.mrf.mxu0
    %v730 = vadd.f32 0.0, %v729
    %731 = vmatmul.bf16.gmra.mxu0 %v691
    %v732 = vpop.f32.mrf.mxu0
    %v733 = vadd.f32 0.0, %v732
    %v734 = vpop.f32.mrf.mxu0
    %v735 = vadd.f32 0.0, %v734
    %736 = vmatmul.bf16.gmra.mxu0 %v692
    %v737 = vpop.f32.mrf.mxu0
    %v738 = vadd.f32 0.0, %v737
    %v739 = vpop.f32.mrf.mxu0
    %v740 = vadd.f32 0.0, %v739
    %741 = vdwg.mxu0
    %v742 = vpack.c.bf16 %v705, %v703
    %v743 = vpack.c.bf16 %v710, %v708
    %v744 = vpack.c.bf16 %v715, %v713
    %v745 = vpack.c.bf16 %v720, %v718
    %v746 = vpack.c.bf16 %v725, %v723
    %v747 = vpack.c.bf16 %v730, %v728
    %v748 = vpack.c.bf16 %v735, %v733
    %v749 = vpack.c.bf16 %v740, %v738
    %750 = vmatpush.bf16.msra.mxu0 %v749
    %751 = vmatpush.bf16.msra.mxu0 %v748
    %752 = vmatpush.bf16.msra.mxu0 %v747
    %753 = vmatpush.bf16.msra.mxu0 %v746
    %754 = vmatpush.bf16.msra.mxu0 %v745
    %755 = vmatpush.bf16.msra.mxu0 %v744
    %756 = vmatpush.bf16.msra.mxu0 %v743
    %757 = vmatpush.bf16.msra.mxu0 %v742
    %758 = vmatmul.bf16.gmra.mxu0 %v344
    %v759 = vpop.f32.mrf.mxu0
    %v760 = vadd.f32 %v93, %v759
    %v761 = vpop.f32.mrf.mxu0
    %v762 = vadd.f32 %v93, %v761
    %763 = vmatmul.bf16.gmra.mxu0 %v345
    %v764 = vpop.f32.mrf.mxu0
    %v765 = vadd.f32 %v93, %v764
    %v766 = vpop.f32.mrf.mxu0
    %v767 = vadd.f32 %v93, %v766
    %768 = vmatmul.bf16.gmra.mxu0 %v346
    %v769 = vpop.f32.mrf.mxu0
    %v770 = vadd.f32 %v93, %v769
    %v771 = vpop.f32.mrf.mxu0
    %v772 = vadd.f32 %v93, %v771
    %773 = vmatmul.bf16.gmra.mxu0 %v347
    %v774 = vpop.f32.mrf.mxu0
    %v775 = vadd.f32 %v93, %v774
    %v776 = vpop.f32.mrf.mxu0
    %v777 = vadd.f32 %v93, %v776
    %778 = vmatmul.bf16.gmra.mxu0 %v348
    %v779 = vpop.f32.mrf.mxu0
    %v780 = vadd.f32 %v93, %v779
    %v781 = vpop.f32.mrf.mxu0
    %v782 = vadd.f32 %v93, %v781
    %783 = vmatmul.bf16.gmra.mxu0 %v349
    %v784 = vpop.f32.mrf.mxu0
    %v785 = vadd.f32 %v93, %v784
    %v786 = vpop.f32.mrf.mxu0
    %v787 = vadd.f32 %v93, %v786
    %788 = vmatmul.bf16.gmra.mxu0 %v350
    %v789 = vpop.f32.mrf.mxu0
    %v790 = vadd.f32 %v93, %v789
    %v791 = vpop.f32.mrf.mxu0
    %v792 = vadd.f32 %v93, %v791
    %793 = vmatmul.bf16.gmra.mxu0 %v351
    %v794 = vpop.f32.mrf.mxu0
    %v795 = vadd.f32 %v93, %v794
    %v796 = vpop.f32.mrf.mxu0
    %v797 = vadd.f32 %v93, %v796
    %798 = vdwg.mxu0
    %v799 = vpack.c.bf16 %v762, %v760
    %v800 = vpack.c.bf16 %v767, %v765
    %v801 = vpack.c.bf16 %v772, %v770
    %v802 = vpack.c.bf16 %v777, %v775
    %v803 = vpack.c.bf16 %v782, %v780
    %v804 = vpack.c.bf16 %v787, %v785
    %v805 = vpack.c.bf16 %v792, %v790
    %v806 = vpack.c.bf16 %v797, %v795
    %807 = vmatpush.bf16.msra.mxu0 %v456
    %808 = vmatpush.bf16.msra.mxu0 %v455
    %809 = vmatpush.bf16.msra.mxu0 %v454
    %810 = vmatpush.bf16.msra.mxu0 %v453
    %811 = vmatpush.bf16.msra.mxu0 %v452
    %812 = vmatpush.bf16.msra.mxu0 %v451
    %813 = vmatpush.bf16.msra.mxu0 %v450
    %814 = vmatpush.bf16.msra.mxu0 %v449
    %815 = vmatmul.bf16.gmra.mxu0 %v799
    %v816 = vpop.f32.mrf.mxu0
    %v817 = vadd.f32 0.0, %v816
    %v818 = vpop.f32.mrf.mxu0
    %v819 = vadd.f32 0.0, %v818
    %820 = vmatmul.bf16.gmra.mxu0 %v800
    %v821 = vpop.f32.mrf.mxu0
    %v822 = vadd.f32 0.0, %v821
    %v823 = vpop.f32.mrf.mxu0
    %v824 = vadd.f32 0.0, %v823
    %825 = vmatmul.bf16.gmra.mxu0 %v801
    %v826 = vpop.f32.mrf.mxu0
    %v827 = vadd.f32 0.0, %v826
    %v828 = vpop.f32.mrf.mxu0
    %v829 = vadd.f32 0.0, %v828
    %830 = vmatmul.bf16.gmra.mxu0 %v802
    %v831 = vpop.f32.mrf.mxu0
    %v832 = vadd.f32 0.0, %v831
    %v833 = vpop.f32.mrf.mxu0
    %v834 = vadd.f32 0.0, %v833
    %835 = vmatmul.bf16.gmra.mxu0 %v803
    %v836 = vpop.f32.mrf.mxu0
    %v837 = vadd.f32 0.0, %v836
    %v838 = vpop.f32.mrf.mxu0
    %v839 = vadd.f32 0.0, %v838
    %840 = vmatmul.bf16.gmra.mxu0 %v804
    %v841 = vpop.f32.mrf.mxu0
    %v842 = vadd.f32 0.0, %v841
    %v843 = vpop.f32.mrf.mxu0
    %v844 = vadd.f32 0.0, %v843
    %845 = vmatmul.bf16.gmra.mxu0 %v805
    %v846 = vpop.f32.mrf.mxu0
    %v847 = vadd.f32 0.0, %v846
    %v848 = vpop.f32.mrf.mxu0
    %v849 = vadd.f32 0.0, %v848
    %850 = vmatmul.bf16.gmra.mxu0 %v806
    %v851 = vpop.f32.mrf.mxu0
    %v852 = vadd.f32 0.0, %v851
    %v853 = vpop.f32.mrf.mxu0
    %v854 = vadd.f32 0.0, %v853
    %855 = vdwg.mxu0
    %v856 = vpack.c.bf16 %v819, %v817
    %v857 = vpack.c.bf16 %v824, %v822
    %v858 = vpack.c.bf16 %v829, %v827
    %v859 = vpack.c.bf16 %v834, %v832
    %v860 = vpack.c.bf16 %v839, %v837
    %v861 = vpack.c.bf16 %v844, %v842
    %v862 = vpack.c.bf16 %v849, %v847
    %v863 = vpack.c.bf16 %v854, %v852
    %864 = vmatpush.bf16.msra.mxu0 %v863
    %865 = vmatpush.bf16.msra.mxu0 %v862
    %866 = vmatpush.bf16.msra.mxu0 %v861
    %867 = vmatpush.bf16.msra.mxu0 %v860
    %868 = vmatpush.bf16.msra.mxu0 %v859
    %869 = vmatpush.bf16.msra.mxu0 %v858
    %870 = vmatpush.bf16.msra.mxu0 %v857
    %871 = vmatpush.bf16.msra.mxu0 %v856
    %872 = vmatmul.bf16.gmra.mxu0 %v344
    %v873 = vpop.f32.mrf.mxu0
    %v874 = vadd.f32 %v93, %v873
    %v875 = vpop.f32.mrf.mxu0
    %v876 = vadd.f32 %v93, %v875
    %877 = vmatmul.bf16.gmra.mxu0 %v345
    %v878 = vpop.f32.mrf.mxu0
    %v879 = vadd.f32 %v93, %v878
    %v880 = vpop.f32.mrf.mxu0
    %v881 = vadd.f32 %v93, %v880
    %882 = vmatmul.bf16.gmra.mxu0 %v346
    %v883 = vpop.f32.mrf.mxu0
    %v884 = vadd.f32 %v93, %v883
    %v885 = vpop.f32.mrf.mxu0
    %v886 = vadd.f32 %v93, %v885
    %887 = vmatmul.bf16.gmra.mxu0 %v347
    %v888 = vpop.f32.mrf.mxu0
    %v889 = vadd.f32 %v93, %v888
    %v890 = vpop.f32.mrf.mxu0
    %v891 = vadd.f32 %v93, %v890
    %892 = vmatmul.bf16.gmra.mxu0 %v348
    %v893 = vpop.f32.mrf.mxu0
    %v894 = vadd.f32 %v93, %v893
    %v895 = vpop.f32.mrf.mxu0
    %v896 = vadd.f32 %v93, %v895
    %897 = vmatmul.bf16.gmra.mxu0 %v349
    %v898 = vpop.f32.mrf.mxu0
    %v899 = vadd.f32 %v93, %v898
    %v900 = vpop.f32.mrf.mxu0
    %v901 = vadd.f32 %v93, %v900
    %902 = vmatmul.bf16.gmra.mxu0 %v350
    %v903 = vpop.f32.mrf.mxu0
    %v904 = vadd.f32 %v93, %v903
    %v905 = vpop.f32.mrf.mxu0
    %v906 = vadd.f32 %v93, %v905
    %907 = vmatmul.bf16.gmra.mxu0 %v351
    %v908 = vpop.f32.mrf.mxu0
    %v909 = vadd.f32 %v93, %v908
    %v910 = vpop.f32.mrf.mxu0
    %v911 = vadd.f32 %v93, %v910
    %912 = vdwg.mxu0
    %v913 = vpack.c.bf16 %v876, %v874
    %v914 = vpack.c.bf16 %v881, %v879
    %v915 = vpack.c.bf16 %v886, %v884
    %v916 = vpack.c.bf16 %v891, %v889
    %v917 = vpack.c.bf16 %v896, %v894
    %v918 = vpack.c.bf16 %v901, %v899
    %v919 = vpack.c.bf16 %v906, %v904
    %v920 = vpack.c.bf16 %v911, %v909
    %921 = vmatpush.bf16.msra.mxu0 %v456
    %922 = vmatpush.bf16.msra.mxu0 %v455
    %923 = vmatpush.bf16.msra.mxu0 %v454
    %924 = vmatpush.bf16.msra.mxu0 %v453
    %925 = vmatpush.bf16.msra.mxu0 %v452
    %926 = vmatpush.bf16.msra.mxu0 %v451
    %927 = vmatpush.bf16.msra.mxu0 %v450
    %928 = vmatpush.bf16.msra.mxu0 %v449
    %929 = vmatmul.bf16.gmra.mxu0 %v913
    %v930 = vpop.f32.mrf.mxu0
    %v931 = vadd.f32 0.0, %v930
    %v932 = vpop.f32.mrf.mxu0
    %v933 = vadd.f32 0.0, %v932
    %934 = vmatmul.bf16.gmra.mxu0 %v914
    %v935 = vpop.f32.mrf.mxu0
    %v936 = vadd.f32 0.0, %v935
    %v937 = vpop.f32.mrf.mxu0
    %v938 = vadd.f32 0.0, %v937
    %939 = vmatmul.bf16.gmra.mxu0 %v915
    %v940 = vpop.f32.mrf.mxu0
    %v941 = vadd.f32 0.0, %v940
    %v942 = vpop.f32.mrf.mxu0
    %v943 = vadd.f32 0.0, %v942
    %944 = vmatmul.bf16.gmra.mxu0 %v916
    %v945 = vpop.f32.mrf.mxu0
    %v946 = vadd.f32 0.0, %v945
    %v947 = vpop.f32.mrf.mxu0
    %v948 = vadd.f32 0.0, %v947
    %949 = vmatmul.bf16.gmra.mxu0 %v917
    %v950 = vpop.f32.mrf.mxu0
    %v951 = vadd.f32 0.0, %v950
    %v952 = vpop.f32.mrf.mxu0
    %v953 = vadd.f32 0.0, %v952
    %954 = vmatmul.bf16.gmra.mxu0 %v918
    %v955 = vpop.f32.mrf.mxu0
    %v956 = vadd.f32 0.0, %v955
    %v957 = vpop.f32.mrf.mxu0
    %v958 = vadd.f32 0.0, %v957
    %959 = vmatmul.bf16.gmra.mxu0 %v919
    %v960 = vpop.f32.mrf.mxu0
    %v961 = vadd.f32 0.0, %v960
    %v962 = vpop.f32.mrf.mxu0
    %v963 = vadd.f32 0.0, %v962
    %964 = vmatmul.bf16.gmra.mxu0 %v920
    %v965 = vpop.f32.mrf.mxu0
    %v966 = vadd.f32 0.0, %v965
    %v967 = vpop.f32.mrf.mxu0
    %v968 = vadd.f32 0.0, %v967
    %969 = vdwg.mxu0
    %v970 = vpack.c.bf16 %v933, %v931
    %v971 = vpack.c.bf16 %v938, %v936
    %v972 = vpack.c.bf16 %v943, %v941
    %v973 = vpack.c.bf16 %v948, %v946
    %v974 = vpack.c.bf16 %v953, %v951
    %v975 = vpack.c.bf16 %v958, %v956
    %v976 = vpack.c.bf16 %v963, %v961
    %v977 = vpack.c.bf16 %v968, %v966
    %978 = vmatpush.bf16.msra.mxu0 %v977
    %979 = vmatpush.bf16.msra.mxu0 %v976
    %980 = vmatpush.bf16.msra.mxu0 %v975
    %981 = vmatpush.bf16.msra.mxu0 %v974
    %982 = vmatpush.bf16.msra.mxu0 %v973
    %983 = vmatpush.bf16.msra.mxu0 %v972
    %984 = vmatpush.bf16.msra.mxu0 %v971
    %985 = vmatpush.bf16.msra.mxu0 %v970
    %986 = vmatmul.bf16.gmra.mxu0 %v344
    %v987 = vpop.f32.mrf.mxu0
    %v988 = vadd.f32 %v93, %v987
    %v989 = vpop.f32.mrf.mxu0
    %v990 = vadd.f32 %v93, %v989
    %991 = vmatmul.bf16.gmra.mxu0 %v345
    %v992 = vpop.f32.mrf.mxu0
    %v993 = vadd.f32 %v93, %v992
    %v994 = vpop.f32.mrf.mxu0
    %v995 = vadd.f32 %v93, %v994
    %996 = vmatmul.bf16.gmra.mxu0 %v346
    %v997 = vpop.f32.mrf.mxu0
    %v998 = vadd.f32 %v93, %v997
    %v999 = vpop.f32.mrf.mxu0
    %v1000 = vadd.f32 %v93, %v999
    %1001 = vmatmul.bf16.gmra.mxu0 %v347
    %v1002 = vpop.f32.mrf.mxu0
    %v1003 = vadd.f32 %v93, %v1002
    %v1004 = vpop.f32.mrf.mxu0
    %v1005 = vadd.f32 %v93, %v1004
    %1006 = vmatmul.bf16.gmra.mxu0 %v348
    %v1007 = vpop.f32.mrf.mxu0
    %v1008 = vadd.f32 %v93, %v1007
    %v1009 = vpop.f32.mrf.mxu0
    %v1010 = vadd.f32 %v93, %v1009
    %1011 = vmatmul.bf16.gmra.mxu0 %v349
    %v1012 = vpop.f32.mrf.mxu0
    %v1013 = vadd.f32 %v93, %v1012
    %v1014 = vpop.f32.mrf.mxu0
    %v1015 = vadd.f32 %v93, %v1014
    %1016 = vmatmul.bf16.gmra.mxu0 %v350
    %v1017 = vpop.f32.mrf.mxu0
    %v1018 = vadd.f32 %v93, %v1017
    %v1019 = vpop.f32.mrf.mxu0
    %v1020 = vadd.f32 %v93, %v1019
    %1021 = vmatmul.bf16.gmra.mxu0 %v351
    %v1022 = vpop.f32.mrf.mxu0
    %v1023 = vadd.f32 %v93, %v1022
    %v1024 = vpop.f32.mrf.mxu0
    %v1025 = vadd.f32 %v93, %v1024
    %1026 = vdwg.mxu0
    %v1027 = vpack.c.bf16 %v990, %v988
    %v1028 = vpack.c.bf16 %v995, %v993
    %v1029 = vpack.c.bf16 %v1000, %v998
    %v1030 = vpack.c.bf16 %v1005, %v1003
    %v1031 = vpack.c.bf16 %v1010, %v1008
    %v1032 = vpack.c.bf16 %v1015, %v1013
    %v1033 = vpack.c.bf16 %v1020, %v1018
    %v1034 = vpack.c.bf16 %v1025, %v1023
    %1035 = vmatpush.bf16.msra.mxu0 %v456
    %1036 = vmatpush.bf16.msra.mxu0 %v455
    %1037 = vmatpush.bf16.msra.mxu0 %v454
    %1038 = vmatpush.bf16.msra.mxu0 %v453
    %1039 = vmatpush.bf16.msra.mxu0 %v452
    %1040 = vmatpush.bf16.msra.mxu0 %v451
    %1041 = vmatpush.bf16.msra.mxu0 %v450
    %1042 = vmatpush.bf16.msra.mxu0 %v449
    %1043 = vmatmul.bf16.gmra.mxu0 %v1027
    %v1044 = vpop.f32.mrf.mxu0
    %v1045 = vadd.f32 0.0, %v1044
    %v1046 = vpop.f32.mrf.mxu0
    %v1047 = vadd.f32 0.0, %v1046
    %1048 = vmatmul.bf16.gmra.mxu0 %v1028
    %v1049 = vpop.f32.mrf.mxu0
    %v1050 = vadd.f32 0.0, %v1049
    %v1051 = vpop.f32.mrf.mxu0
    %v1052 = vadd.f32 0.0, %v1051
    %1053 = vmatmul.bf16.gmra.mxu0 %v1029
    %v1054 = vpop.f32.mrf.mxu0
    %v1055 = vadd.f32 0.0, %v1054
    %v1056 = vpop.f32.mrf.mxu0
    %v1057 = vadd.f32 0.0, %v1056
    %1058 = vmatmul.bf16.gmra.mxu0 %v1030
    %v1059 = vpop.f32.mrf.mxu0
    %v1060 = vadd.f32 0.0, %v1059
    %v1061 = vpop.f32.mrf.mxu0
    %v1062 = vadd.f32 0.0, %v1061
    %1063 = vmatmul.bf16.gmra.mxu0 %v1031
    %v1064 = vpop.f32.mrf.mxu0
    %v1065 = vadd.f32 0.0, %v1064
    %v1066 = vpop.f32.mrf.mxu0
    %v1067 = vadd.f32 0.0, %v1066
    %1068 = vmatmul.bf16.gmra.mxu0 %v1032
    %v1069 = vpop.f32.mrf.mxu0
    %v1070 = vadd.f32 0.0, %v1069
    %v1071 = vpop.f32.mrf.mxu0
    %v1072 = vadd.f32 0.0, %v1071
    %1073 = vmatmul.bf16.gmra.mxu0 %v1033
    %v1074 = vpop.f32.mrf.mxu0
    %v1075 = vadd.f32 0.0, %v1074
    %v1076 = vpop.f32.mrf.mxu0
    %v1077 = vadd.f32 0.0, %v1076
    %1078 = vmatmul.bf16.gmra.mxu0 %v1034
    %v1079 = vpop.f32.mrf.mxu0
    %v1080 = vadd.f32 0.0, %v1079
    %v1081 = vpop.f32.mrf.mxu0
    %v1082 = vadd.f32 0.0, %v1081
    %1083 = vdwg.mxu0
    %v1084 = vpack.c.bf16 %v1047, %v1045
    %v1085 = vpack.c.bf16 %v1052, %v1050
    %v1086 = vpack.c.bf16 %v1057, %v1055
    %v1087 = vpack.c.bf16 %v1062, %v1060
    %v1088 = vpack.c.bf16 %v1067, %v1065
    %v1089 = vpack.c.bf16 %v1072, %v1070
    %v1090 = vpack.c.bf16 %v1077, %v1075
    %v1091 = vpack.c.bf16 %v1082, %v1080
    %1092 = vmatpush.bf16.msra.mxu0 %v1091
    %1093 = vmatpush.bf16.msra.mxu0 %v1090
    %1094 = vmatpush.bf16.msra.mxu0 %v1089
    %1095 = vmatpush.bf16.msra.mxu0 %v1088
    %1096 = vmatpush.bf16.msra.mxu0 %v1087
    %1097 = vmatpush.bf16.msra.mxu0 %v1086
    %1098 = vmatpush.bf16.msra.mxu0 %v1085
    %1099 = vmatpush.bf16.msra.mxu0 %v1084
    %1100 = vmatmul.bf16.gmra.mxu0 %v344
    %v1101 = vpop.f32.mrf.mxu0
    %v1102 = vadd.f32 %v93, %v1101
    %v1103 = vpop.f32.mrf.mxu0
    %v1104 = vadd.f32 %v93, %v1103
    %1105 = vmatmul.bf16.gmra.mxu0 %v345
    %v1106 = vpop.f32.mrf.mxu0
    %v1107 = vadd.f32 %v93, %v1106
    %v1108 = vpop.f32.mrf.mxu0
    %v1109 = vadd.f32 %v93, %v1108
    %1110 = vmatmul.bf16.gmra.mxu0 %v346
    %v1111 = vpop.f32.mrf.mxu0
    %v1112 = vadd.f32 %v93, %v1111
    %v1113 = vpop.f32.mrf.mxu0
    %v1114 = vadd.f32 %v93, %v1113
    %1115 = vmatmul.bf16.gmra.mxu0 %v347
    %v1116 = vpop.f32.mrf.mxu0
    %v1117 = vadd.f32 %v93, %v1116
    %v1118 = vpop.f32.mrf.mxu0
    %v1119 = vadd.f32 %v93, %v1118
    %1120 = vmatmul.bf16.gmra.mxu0 %v348
    %v1121 = vpop.f32.mrf.mxu0
    %v1122 = vadd.f32 %v93, %v1121
    %v1123 = vpop.f32.mrf.mxu0
    %v1124 = vadd.f32 %v93, %v1123
    %1125 = vmatmul.bf16.gmra.mxu0 %v349
    %v1126 = vpop.f32.mrf.mxu0
    %v1127 = vadd.f32 %v93, %v1126
    %v1128 = vpop.f32.mrf.mxu0
    %v1129 = vadd.f32 %v93, %v1128
    %1130 = vmatmul.bf16.gmra.mxu0 %v350
    %v1131 = vpop.f32.mrf.mxu0
    %v1132 = vadd.f32 %v93, %v1131
    %v1133 = vpop.f32.mrf.mxu0
    %v1134 = vadd.f32 %v93, %v1133
    %1135 = vmatmul.bf16.gmra.mxu0 %v351
    %v1136 = vpop.f32.mrf.mxu0
    %v1137 = vadd.f32 %v93, %v1136
    %v1138 = vpop.f32.mrf.mxu0
    %v1139 = vadd.f32 %v93, %v1138
    %1140 = vdwg.mxu0
    %v1141 = vpack.c.bf16 %v1104, %v1102
    %v1142 = vpack.c.bf16 %v1109, %v1107
    %v1143 = vpack.c.bf16 %v1114, %v1112
    %v1144 = vpack.c.bf16 %v1119, %v1117
    %v1145 = vpack.c.bf16 %v1124, %v1122
    %v1146 = vpack.c.bf16 %v1129, %v1127
    %v1147 = vpack.c.bf16 %v1134, %v1132
    %v1148 = vpack.c.bf16 %v1139, %v1137
    %1149 = vmatpush.bf16.msra.mxu0 %v456
    %1150 = vmatpush.bf16.msra.mxu0 %v455
    %1151 = vmatpush.bf16.msra.mxu0 %v454
    %1152 = vmatpush.bf16.msra.mxu0 %v453
    %1153 = vmatpush.bf16.msra.mxu0 %v452
    %1154 = vmatpush.bf16.msra.mxu0 %v451
    %1155 = vmatpush.bf16.msra.mxu0 %v450
    %1156 = vmatpush.bf16.msra.mxu0 %v449
    %1157 = vmatmul.bf16.gmra.mxu0 %v1141
    %v1158 = vpop.f32.mrf.mxu0
    %v1159 = vadd.f32 0.0, %v1158
    %v1160 = vpop.f32.mrf.mxu0
    %v1161 = vadd.f32 0.0, %v1160
    %1162 = vmatmul.bf16.gmra.mxu0 %v1142
    %v1163 = vpop.f32.mrf.mxu0
    %v1164 = vadd.f32 0.0, %v1163
    %v1165 = vpop.f32.mrf.mxu0
    %v1166 = vadd.f32 0.0, %v1165
    %1167 = vmatmul.bf16.gmra.mxu0 %v1143
    %v1168 = vpop.f32.mrf.mxu0
    %v1169 = vadd.f32 0.0, %v1168
    %v1170 = vpop.f32.mrf.mxu0
    %v1171 = vadd.f32 0.0, %v1170
    %1172 = vmatmul.bf16.gmra.mxu0 %v1144
    %v1173 = vpop.f32.mrf.mxu0
    %v1174 = vadd.f32 0.0, %v1173
    %v1175 = vpop.f32.mrf.mxu0
    %v1176 = vadd.f32 0.0, %v1175
    %1177 = vmatmul.bf16.gmra.mxu0 %v1145
    %v1178 = vpop.f32.mrf.mxu0
    %v1179 = vadd.f32 0.0, %v1178
    %v1180 = vpop.f32.mrf.mxu0
    %v1181 = vadd.f32 0.0, %v1180
    %1182 = vmatmul.bf16.gmra.mxu0 %v1146
    %v1183 = vpop.f32.mrf.mxu0
    %v1184 = vadd.f32 0.0, %v1183
    %v1185 = vpop.f32.mrf.mxu0
    %v1186 = vadd.f32 0.0, %v1185
    %1187 = vmatmul.bf16.gmra.mxu0 %v1147
    %v1188 = vpop.f32.mrf.mxu0
    %v1189 = vadd.f32 0.0, %v1188
    %v1190 = vpop.f32.mrf.mxu0
    %v1191 = vadd.f32 0.0, %v1190
    %1192 = vmatmul.bf16.gmra.mxu0 %v1148
    %v1193 = vpop.f32.mrf.mxu0
    %v1194 = vadd.f32 0.0, %v1193
    %v1195 = vpop.f32.mrf.mxu0
    %v1196 = vadd.f32 0.0, %v1195
    %1197 = vdwg.mxu0
    %v1198 = vpack.c.bf16 %v1161, %v1159
    %v1199 = vpack.c.bf16 %v1166, %v1164
    %v1200 = vpack.c.bf16 %v1171, %v1169
    %v1201 = vpack.c.bf16 %v1176, %v1174
    %v1202 = vpack.c.bf16 %v1181, %v1179
    %v1203 = vpack.c.bf16 %v1186, %v1184
    %v1204 = vpack.c.bf16 %v1191, %v1189
    %v1205 = vpack.c.bf16 %v1196, %v1194
    %1206 = vmatpush.bf16.msra.mxu0 %v1205
    %1207 = vmatpush.bf16.msra.mxu0 %v1204
    %1208 = vmatpush.bf16.msra.mxu0 %v1203
    %1209 = vmatpush.bf16.msra.mxu0 %v1202
    %1210 = vmatpush.bf16.msra.mxu0 %v1201
    %1211 = vmatpush.bf16.msra.mxu0 %v1200
    %1212 = vmatpush.bf16.msra.mxu0 %v1199
    %1213 = vmatpush.bf16.msra.mxu0 %v1198
    %1214 = vmatmul.bf16.gmra.mxu0 %v344
    %v1215 = vpop.f32.mrf.mxu0
    %v1216 = vadd.f32 %v93, %v1215
    %v1217 = vpop.f32.mrf.mxu0
    %v1218 = vadd.f32 %v93, %v1217
    %1219 = vmatmul.bf16.gmra.mxu0 %v345
    %v1220 = vpop.f32.mrf.mxu0
    %v1221 = vadd.f32 %v93, %v1220
    %v1222 = vpop.f32.mrf.mxu0
    %v1223 = vadd.f32 %v93, %v1222
    %1224 = vmatmul.bf16.gmra.mxu0 %v346
    %v1225 = vpop.f32.mrf.mxu0
    %v1226 = vadd.f32 %v93, %v1225
    %v1227 = vpop.f32.mrf.mxu0
    %v1228 = vadd.f32 %v93, %v1227
    %1229 = vmatmul.bf16.gmra.mxu0 %v347
    %v1230 = vpop.f32.mrf.mxu0
    %v1231 = vadd.f32 %v93, %v1230
    %v1232 = vpop.f32.mrf.mxu0
    %v1233 = vadd.f32 %v93, %v1232
    %1234 = vmatmul.bf16.gmra.mxu0 %v348
    %v1235 = vpop.f32.mrf.mxu0
    %v1236 = vadd.f32 %v93, %v1235
    %v1237 = vpop.f32.mrf.mxu0
    %v1238 = vadd.f32 %v93, %v1237
    %1239 = vmatmul.bf16.gmra.mxu0 %v349
    %v1240 = vpop.f32.mrf.mxu0
    %v1241 = vadd.f32 %v93, %v1240
    %v1242 = vpop.f32.mrf.mxu0
    %v1243 = vadd.f32 %v93, %v1242
    %1244 = vmatmul.bf16.gmra.mxu0 %v350
    %v1245 = vpop.f32.mrf.mxu0
    %v1246 = vadd.f32 %v93, %v1245
    %v1247 = vpop.f32.mrf.mxu0
    %v1248 = vadd.f32 %v93, %v1247
    %1249 = vmatmul.bf16.gmra.mxu0 %v351
    %v1250 = vpop.f32.mrf.mxu0
    %v1251 = vadd.f32 %v93, %v1250
    %v1252 = vpop.f32.mrf.mxu0
    %v1253 = vadd.f32 %v93, %v1252
    %1254 = vdwg.mxu0
    %1255 = vst [vmem:[#allocation10] sm:$0xff] %v1216
    %1256 = vst [vmem:[#allocation10 + $0x8] sm:$0xff] %v1218
    %1257 = vst [vmem:[#allocation10 + $0x10] sm:$0xff] %v1221
    %1258 = vst [vmem:[#allocation10 + $0x18] sm:$0xff] %v1223
    %1259 = vst [vmem:[#allocation10 + $0x20] sm:$0xff] %v1226
    %1260 = vst [vmem:[#allocation10 + $0x28] sm:$0xff] %v1228
    %1261 = vst [vmem:[#allocation10 + $0x30] sm:$0xff] %v1231
    %1262 = vst [vmem:[#allocation10 + $0x38] sm:$0xff] %v1233
    %1263 = vst [vmem:[#allocation10 + $0x40] sm:$0xff] %v1236
    %1264 = vst [vmem:[#allocation10 + $0x48] sm:$0xff] %v1238
    %1265 = vst [vmem:[#allocation10 + $0x50] sm:$0xff] %v1241
    %1266 = vst [vmem:[#allocation10 + $0x58] sm:$0xff] %v1243
    %1267 = vst [vmem:[#allocation10 + $0x60] sm:$0xff] %v1246
    %1268 = vst [vmem:[#allocation10 + $0x68] sm:$0xff] %v1248
    %1269 = vst [vmem:[#allocation10 + $0x70] sm:$0xff] %v1251
    %1270 = vst [vmem:[#allocation10 + $0x78] sm:$0xff] %v1253
    // Predicated region
    $region42: #{tpu_custom_call.1} parent=1 // pred_check
      _
    $region43: #{tpu_custom_call.1} parent=1 // pred_check_branch
      %1272 = sbr.rel (0) target = $region45
    $region44: #{tpu_custom_call.1} parent=1 // pred_region
      %1274 = vsyncadd [#allocation4], 0
      %s1275 = sshll.u32 [#allocation10], 4
      %s1276 = int_to_ptr.vmem [resolvable:$true] %s1275
      %s1277 = sshll.u32 %s6, 4
      %s1278 = int_to_ptr.hbm [resolvable:$true] %s1277
      %1283 = dma.vmem_to_hbm [thread:$0]  %s1276, 2048, %s1278, [#allocation4], 128, 128, 8
    $region45: #{tpu_custom_call.1} parent=1 // pred_fallthru
      _
    // Predicated region
    $region46: #{tpu_custom_call.1} parent=1 // pred_check
      _
    $region47: #{tpu_custom_call.1} parent=1 // pred_check_branch
      %1285 = sbr.rel (0) target = $region49
    $region48: #{tpu_custom_call.1} parent=1 // pred_region
      %1287 = dma.done [#allocation4], 2048
    $region49: #{tpu_custom_call.1} parent=1 // pred_fallthru
      _
    %1288 = vsyncpa [#allocation3], 1
    %1289 = vsyncpa [#allocation6], 1
    %1290 = vsyncpa [#allocation9], 1
    %1291 = vsyncpa [#allocation4], 1

</llo_original>
